<compile_context>
chip_gen: v7x
topology: tpu7x:2x2x1
jax: 0.10.0
libtpu: 0.0.40
codegen_flags: <defaults>
</compile_context>

<pallas_src>
import jax
import jax.numpy as jnp
from jax.experimental import pallas as pl
from jax.experimental.pallas import tpu as pltpu


def _make_svm_kernel(tm, lanes, rows, nblocks, spc, need_mask):
    def kernel(x_ref, y_ref, o_ref):
        # Zero this core's resident accumulator slab on its first reduction step.
        @pl.when(pl.program_id(1) == 0)
        def _():
            o_ref[...] = jnp.zeros_like(o_ref)

        t1 = x_ref[...].astype(jnp.float32) * y_ref[...].astype(jnp.float32)
        ones = t1 / t1                # NaN where t1 == 0 (matches the torch graph)
        t2 = ones - t1
        el = jnp.maximum(t2, 0.0)     # torch max(temp2, temp2 - temp2); NaN still propagates
        el = el * el

        if need_mask:
            # Only present when the last block is partial or a core got a duplicated
            # (clamped) block: zero out rows that are outside the real data.
            blk = pl.program_id(0) * spc + pl.program_id(1)
            base = jnp.minimum(blk, nblocks - 1)      # matches the clamped index_map
            row_ids = base * tm + jax.lax.broadcasted_iota(jnp.int32, (tm, lanes), 0)
            valid = (row_ids < rows) & (blk < nblocks)
            el = jnp.where(valid, el, 0.0)

        # vreg-shaped accumulation: (tm,128) -> (tm//8,8,128), sum over axis 0 (VPU only).
        o_ref[...] += jnp.sum(el.reshape(tm // 8, 8, lanes), axis=0)

    return kernel


def _hinge_sq_sum(x, y):
    # Same elementwise graph in plain JAX (used only for the <128-element tail).
    t1 = x.astype(jnp.float32) * y.astype(jnp.float32)
    return jnp.sum(jnp.maximum(t1 / t1 - t1, 0.0) ** 2)


def svm_loss(output, y, C, *, tm=2048, lanes=128, num_cores=2):
    """C * mean(max(1 - output*y, 0)^2), with the torch NaN-on-zero quirk preserved."""
    assert output.shape == y.shape
    n = output.size

    x_flat = output.reshape(-1)
    y_flat = y.reshape(-1)

    rows = n // lanes
    n_bulk = rows * lanes
    rem = n - n_bulk

    total = jnp.float32(0.0)

    if rows > 0:
        # Adapt tile height to the data; keep it a multiple of 8 sublanes.
        tm_eff = min(tm, ((rows + 7) // 8) * 8)
        nblocks = -(-rows // tm_eff)                 # ceil
        ncores_eff = min(num_cores, nblocks)         # leading "parallel" axis (v7x megacore)
        spc = -(-nblocks // ncores_eff)              # reduction steps per core
        need_mask = (nblocks * tm_eff != rows) or (ncores_eff * spc != nblocks)

        # Contiguous slice + reshape, original dtype: no concatenate / cast copies.
        x2 = x_flat[:n_bulk].reshape(rows, lanes)
        y2 = y_flat[:n_bulk].reshape(rows, lanes)

        if ncores_eff * spc == nblocks:
            in_map = lambda c, i: (c * spc + i, 0)
        else:
            # Clamp so duplicated trailing steps re-read the last in-bounds block
            # (their contribution is masked to zero in-kernel).
            in_map = lambda c, i: (jnp.minimum(c * spc + i, nblocks - 1), 0)

        block_bytes = tm_eff * lanes * (x2.dtype.itemsize + y2.dtype.itemsize)
        # 2x double-buffering of both inputs + headroom; floor at 16 MiB, cap at 64 MiB (v7x).
        vmem_limit = int(min(64 << 20, max(16 << 20, 2 * block_bytes + (8 << 20))))

        partials = pl.pallas_call(
            _make_svm_kernel(tm_eff, lanes, rows, nblocks, spc, need_mask),
            out_shape=jax.ShapeDtypeStruct((8 * ncores_eff, lanes), jnp.float32),
            grid_spec=pltpu.PrefetchScalarGridSpec(
                num_scalar_prefetch=0,
                grid=(ncores_eff, spc),
                in_specs=[
                    pl.BlockSpec((tm_eff, lanes), in_map),
                    pl.BlockSpec((tm_eff, lanes), in_map),
                ],
                # Lane-dense per-core partial slab; resident across the reduction axis.
                out_specs=pl.BlockSpec((8, lanes), lambda c, i: (c, 0)),
            ),
            compiler_params=pltpu.CompilerParams(
                dimension_semantics=("parallel", "arbitrary"),
                vmem_limit_bytes=vmem_limit,
            ),
        )(x2, y2)
        total = total + jnp.sum(partials)

    if rem:
        # <128-element remainder: trivial scalar glue, no extra HBM pass over the bulk.
        total = total + _hinge_sq_sum(x_flat[n_bulk:], y_flat[n_bulk:])

    return jnp.float32(C) * total / jnp.float32(n)


if __name__ == "__main__":
    C = 0.5
    key = jax.random.PRNGKey(0)
    k1, k2 = jax.random.split(key)

    # Small NCHW-shaped example: batch=2, channels=4, spatial=16x16.
    output = jax.random.normal(k1, (2, 4, 16, 16), dtype=jnp.float32)
    # Labels in {-1, +1}, as typical for SVM loss (also keeps temp1 != 0).
    y = jnp.where(jax.random.bernoulli(k2, 0.5, (2, 4, 16, 16)), 1.0, -1.0).astype(
        jnp.float32
    )

    loss = jax.block_until_ready(svm_loss(output, y, C))

    # Pure-JAX reference of the exact PyTorch graph.
    t1 = (output * y).reshape(-1)
    ref = C * jnp.mean(jnp.maximum(t1 / t1 - t1, 0.0) ** 2)

    assert jnp.allclose(loss, ref, rtol=1e-5, atol=1e-6), (loss, ref)
    print("KERNEL_OK")
</pallas_src>

<mosaic_0001>
module attributes {stable_mosaic.version = 11 : i64} {
  func.func @kernel(%arg0: i32, %arg1: i32, %arg2: memref<16x128xf32, #tpu.memory_space<vmem>>, %arg3: memref<16x128xf32, #tpu.memory_space<vmem>>, %arg4: memref<8x128xf32, #tpu.memory_space<vmem>>) attributes {dimension_semantics = [#tpu.dimension_semantics<parallel>, #tpu.dimension_semantics<arbitrary>], iteration_bounds = array<i64: 1, 1>, scalar_prefetch = 0 : i64, scratch_operands = 0 : i64, tpu.core_type = #tpu.core_type<tc>, window_params = [{transform_indices = @transform_0, window_bounds = array<i64: 16, 128>}, {transform_indices = @transform_1, window_bounds = array<i64: 16, 128>}, {transform_indices = @transform_2, window_bounds = array<i64: 8, 128>}]} {
    %c0_i32 = arith.constant 0 : i32
    %0 = arith.cmpi eq, %arg1, %c0_i32 : i32
    %1 = arith.extui %0 : i1 to i32
    %c0_i32_0 = arith.constant 0 : i32
    %2 = arith.cmpi ne, %1, %c0_i32_0 : i32
    scf.if %2 {
      %cst_9 = arith.constant 0.000000e+00 : f32
      %16 = vector.broadcast %cst_9 : f32 to vector<8x128xf32>
      %c0_10 = arith.constant 0 : index
      %c0_11 = arith.constant 0 : index
      %17 = vector.load %arg4[%c0_10, %c0_11] : memref<8x128xf32, #tpu.memory_space<vmem>>, vector<8x128xf32>
      tpu.vector_store %arg4[%c0_10, %c0_11], %16 {strides = array<i32>} : memref<8x128xf32, #tpu.memory_space<vmem>>, vector<8x128xf32>,
    } else {
    }
    %c0 = arith.constant 0 : index
    %c0_1 = arith.constant 0 : index
    %3 = vector.load %arg2[%c0, %c0_1] : memref<16x128xf32, #tpu.memory_space<vmem>>, vector<16x128xf32>
    %c0_2 = arith.constant 0 : index
    %c0_3 = arith.constant 0 : index
    %4 = vector.load %arg3[%c0_2, %c0_3] : memref<16x128xf32, #tpu.memory_space<vmem>>, vector<16x128xf32>
    %5 = arith.mulf %3, %4 : vector<16x128xf32>
    %6 = arith.divf %5, %5 : vector<16x128xf32>
    %7 = arith.subf %6, %5 : vector<16x128xf32>
    %cst = arith.constant 0.000000e+00 : f32
    %8 = vector.broadcast %cst : f32 to vector<16x128xf32>
    %9 = arith.maximumf %7, %8 : vector<16x128xf32>
    %10 = arith.mulf %9, %9 : vector<16x128xf32>
    %c0_4 = arith.constant 0 : index
    %c0_5 = arith.constant 0 : index
    %11 = vector.load %arg4[%c0_4, %c0_5] : memref<8x128xf32, #tpu.memory_space<vmem>>, vector<8x128xf32>
    %12 = vector.shape_cast %10 : vector<16x128xf32> to vector<2x8x128xf32>
    %cst_6 = arith.constant dense<0.000000e+00> : vector<8x128xf32>
    %13 = vector.multi_reduction <add>, %12, %cst_6 [0] : vector<2x8x128xf32> to vector<8x128xf32>
    %14 = arith.addf %11, %13 : vector<8x128xf32>
    %c0_7 = arith.constant 0 : index
    %c0_8 = arith.constant 0 : index
    %15 = vector.load %arg4[%c0_7, %c0_8] : memref<8x128xf32, #tpu.memory_space<vmem>>, vector<8x128xf32>
    tpu.vector_store %arg4[%c0_7, %c0_8], %14 {strides = array<i32>} : memref<8x128xf32, #tpu.memory_space<vmem>>, vector<8x128xf32>,
    return
  }
  func.func @transform_0(%arg0: i32, %arg1: i32) -> (i32, i32) {
    %c1_i32 = arith.constant 1 : i32
    %0 = arith.muli %arg0, %c1_i32 : i32
    %1 = arith.addi %0, %arg1 : i32
    %c0_i32 = arith.constant 0 : i32
    %c0_i32_0 = arith.constant 0 : i32
    return %1, %c0_i32 : i32, i32
  }
  func.func @transform_1(%arg0: i32, %arg1: i32) -> (i32, i32) {
    %c1_i32 = arith.constant 1 : i32
    %0 = arith.muli %arg0, %c1_i32 : i32
    %1 = arith.addi %0, %arg1 : i32
    %c0_i32 = arith.constant 0 : i32
    %c0_i32_0 = arith.constant 0 : i32
    return %1, %c0_i32 : i32, i32
  }
  func.func @transform_2(%arg0: i32, %arg1: i32) -> (i32, i32) {
    %c0_i32 = arith.constant 0 : i32
    %c0_i32_0 = arith.constant 0 : i32
    return %arg0, %c0_i32 : i32, i32
  }
}

</mosaic_0001>

<llo_original>
// kernel: tpu_custom_call.1
$region0: #{tpu_custom_call.1}
  #allocation0 [shape = 'u32[]', space=smem, size = 0x4, offset = 0x4, fixed_abs, tag = 'smem constant byte address 0x4 - core index']
  #allocation1 [shape = 'u32[144,128]{1,0:T(1,128)}', space=vmem, size = 0x12000, scoped, tag = 'internal scratch']
  %s0 = inlined_call_operand.hbm [shape: f32[16,128], index: 0, kind: input, shape index: {}]
  %s1 = inlined_call_operand.hbm [shape: f32[16,128], index: 1, kind: input, shape index: {}]
  %s2 = inlined_call_operand.hbm [shape: f32[8,128], index: 2, kind: output, shape index: {}]
  %s3 = sld [smem:[#allocation0]]
  $region30: #{tpu_custom_call.1} parent=0
    _
  %s5 = ssub.s32 1, %s3
  %s6 = scalar_select 0, %s5, %s3
  $region1: #{tpu_custom_call.1} parent=0
    #allocation2 [shape = 'u8[8192]{0}', space=vmem, size = 0x2000, scoped, tag = 'input window, operand 0, single buffered']
    #allocation3 [shape = 's32[1]{0}', space=sflag, size = 0x4, scoped, tag = 'scoped memory for tpu_custom_call.1']
    #allocation4 [shape = 's32[1]{0}', space=sflag, size = 0x4, scoped, tag = 'scoped memory for tpu_custom_call.1']
    #allocation5 [shape = 'u8[8192]{0}', space=vmem, size = 0x2000, scoped, tag = 'input window, operand 1, single buffered']
    #allocation6 [shape = 's32[1]{0}', space=sflag, size = 0x4, scoped, tag = 'scoped memory for tpu_custom_call.1']
    #allocation7 [shape = 'u8[4096]{0}', space=vmem, size = 0x1000, scoped, tag = 'output window, operand 0, single buffered']
    %7 = vsyncpa [#allocation3], 0
    %8 = vsyncpa [#allocation6], 0
    %9 = vsyncpa [#allocation4], 0
    // Predicated region
    $region2: #{tpu_custom_call.1} parent=1 // pred_check
      _
    $region3: #{tpu_custom_call.1} parent=1 // pred_check_branch
      %11 = sbr.rel (0) target = $region5
    $region4: #{tpu_custom_call.1} parent=1 // pred_region
      %s12 = sadd.s32 0, 0
      %s13 = smul.u32 2, %s12
      %s15 = ssub.s32 256, 256
      %16 = vsyncadd [#allocation3], %s15
      %s17 = smul.addr %s13, 128
      %s18 = scalar_lea.hbm %s0, %s17
      %s19 = sshll.u32 [#allocation2], 4
      %s20 = int_to_ptr.vmem [resolvable:$true] %s19
      %25 = dma.hbm_to_vmem [thread:$0]  %s18, 256, %s20, [#allocation3], 128, 128, 8
    $region5: #{tpu_custom_call.1} parent=1 // pred_fallthru
      _
    // Predicated region
    $region6: #{tpu_custom_call.1} parent=1 // pred_check
      _
    $region7: #{tpu_custom_call.1} parent=1 // pred_check_branch
      %27 = sbr.rel (0) target = $region9
    $region8: #{tpu_custom_call.1} parent=1 // pred_region
      %s28 = sadd.s32 0, 0
      %s29 = smul.u32 2, %s28
      %s31 = ssub.s32 256, 256
      %32 = vsyncadd [#allocation6], %s31
      %s33 = smul.addr %s29, 128
      %s34 = scalar_lea.hbm %s1, %s33
      %s35 = sshll.u32 [#allocation5], 4
      %s36 = int_to_ptr.vmem [resolvable:$true] %s35
      %41 = dma.hbm_to_vmem [thread:$0]  %s34, 256, %s36, [#allocation6], 128, 128, 8
    $region9: #{tpu_custom_call.1} parent=1 // pred_fallthru
      _
    // Predicated region
    $region10: #{tpu_custom_call.1} parent=1 // pred_check
      _
    $region11: #{tpu_custom_call.1} parent=1 // pred_check_branch
      %43 = sbr.rel (0) target = $region13
    $region12: #{tpu_custom_call.1} parent=1 // pred_region
      %44 = dma.done [#allocation3], 256
    $region13: #{tpu_custom_call.1} parent=1 // pred_fallthru
      _
    // Predicated region
    $region14: #{tpu_custom_call.1} parent=1 // pred_check
      _
    $region15: #{tpu_custom_call.1} parent=1 // pred_check_branch
      %46 = sbr.rel (0) target = $region17
    $region16: #{tpu_custom_call.1} parent=1 // pred_region
      %47 = dma.done [#allocation6], 256
    $region17: #{tpu_custom_call.1} parent=1 // pred_fallthru
      _
    %s48 = sadd.s32 0, 0
    %s49 = smul.u32 2, %s48
    %s50 = sadd.s32 0, 0
    %s51 = smul.u32 2, %s50
    %p52 = scmp.eq.s32.totalorder 0, 0
    // Predicated region
    $region18: #{tpu_custom_call.1} parent=1 // pred_check
      %p53 = pneg %p52
    $region19: #{tpu_custom_call.1} parent=1 // pred_check_branch
      %55 = sbr.rel (%p53) target = $region21
    $region20: #{tpu_custom_call.1} parent=1 // pred_region
      %56 = vst [vmem:[#allocation7] sm:$0xff] 0.0
    $region21: #{tpu_custom_call.1} parent=1 // pred_fallthru
      _
    %v57 = vld [vmem:[#allocation2] sm:$0xff]
    %v58 = vld [vmem:[#allocation2 + $0x8] sm:$0xff]
    %v59 = vld [vmem:[#allocation5] sm:$0xff]
    %v60 = vld [vmem:[#allocation5 + $0x8] sm:$0xff]
    %v61 = vmul.f32 %v57, %v59
    %v62 = vmul.f32 %v58, %v60
    %v63 = vrcp.pop %v61
    %v64 = vmul.f32 %v61, %v63
    %v65 = vrcp.pop %v62
    %v66 = vmul.f32 %v62, %v65
    %v67 = vsub.f32 %v64, %v61
    %v68 = vsub.f32 %v66, %v62
    %v69 = vmax.f32 %v67, 0.0
    %v70 = vmax.f32 %v68, 0.0
    %v71 = vmul.f32 %v69, %v69
    %v72 = vmul.f32 %v70, %v70
    %v73 = vld [vmem:[#allocation7] sm:$0xff]
    %v74 = vadd.f32 %v71, %v72
    %v75 = vadd.f32 %v73, %v74
    %76 = vst [vmem:[#allocation7] sm:$0xff] %v75
    // Predicated region
    $region22: #{tpu_custom_call.1} parent=1 // pred_check
      _
    $region23: #{tpu_custom_call.1} parent=1 // pred_check_branch
      %78 = sbr.rel (0) target = $region25
    $region24: #{tpu_custom_call.1} parent=1 // pred_region
      %s80 = ssub.s32 128, 128
      %81 = vsyncadd [#allocation4], %s80
      %s83 = sshll.u32 [#allocation7], 4
      %s84 = int_to_ptr.vmem [resolvable:$true] %s83
      %86 = dma.vmem_to_hbm [thread:$0]  %s84, 128, %s2, [#allocation4]
    $region25: #{tpu_custom_call.1} parent=1 // pred_fallthru
      _
    // Predicated region
    $region26: #{tpu_custom_call.1} parent=1 // pred_check
      _
    $region27: #{tpu_custom_call.1} parent=1 // pred_check_branch
      %88 = sbr.rel (0) target = $region29
    $region28: #{tpu_custom_call.1} parent=1 // pred_region
      %89 = dma.done [#allocation4], 128
    $region29: #{tpu_custom_call.1} parent=1 // pred_fallthru
      _
    %90 = vsyncpa [#allocation3], 1
    %91 = vsyncpa [#allocation6], 1
    %92 = vsyncpa [#allocation4], 1

</llo_original>
